<compile_context>
chip_gen: v7x
topology: tpu7x:2x2x1
jax: 0.10.0
libtpu: 0.0.40
codegen_flags: <defaults>
</compile_context>

<pallas_src>
import math

import jax
import jax.numpy as jnp
from jax.experimental import pallas as pl
from jax.experimental.pallas import tpu as pltpu

ALPHABET = 'ABCDEFGHIJKLMNOPQRSTUVWXYZ\n'
VOCAB_SIZE = len(ALPHABET)          # 27
EMBEDDING_SIZE = 16
CONTEXT_LENGTH = 3
HIDDEN_SIZE = 64
VOCAB_PAD = 128                     # lane-dense padded logits width
K_PAD = 128                         # lane/MXU-aligned padded C*V (81 -> 128)
ID_BITS = 5                         # 5 bits per token id (VOCAB_SIZE <= 32)


def _round_up(x, m):
    return ((x + m - 1) // m) * m


def _choose_batch_tile(batch, max_tile):
    """Row tile: multiple of 8, >= 2 grid steps when possible, 512-aligned when big."""
    b8 = _round_up(max(batch, 1), 8)
    tb = _round_up(pl.cdiv(b8, 2), 8)   # aim for >= 2 tiles (v7x has 2 TensorCores)
    if tb > 512:
        tb = _round_up(tb, 512)         # lane-friendly large tiles
    return max(8, min(max_tile, tb))


def mlp_kernel(x_ref, m_ref, b1_ref, w2_ref, b2_ref, out_ref):
    # x_ref:  (TB, 1) int32, 3 token ids packed 5 bits apiece
    # m_ref:  (K_PAD, H)     folded (embedding @ W1-slot) tables, rows >= C*V are zero
    # b1_ref: (1, H) f32     w2_ref: (H, VOCAB_PAD)     b2_ref: (1, VOCAB_PAD) f32
    # out_ref:(TB, VOCAB_PAD) f32
    tb = x_ref.shape[0]
    cdt = m_ref.dtype                                   # compute dtype fed to the MXU
    packed = x_ref[...]                                 # (TB, 1)
    mask = (1 << ID_BITS) - 1

    col = jax.lax.broadcasted_iota(jnp.int32, (tb, K_PAD), 1)
    # Multi-hot: slot c occupies columns [c*V, (c+1)*V); slots never overlap for
    # valid ids in [0, VOCAB_SIZE).
    hot = col == (packed & mask)
    for c in range(1, CONTEXT_LENGTH):
        hot = hot | (col == ((packed >> (ID_BITS * c)) & mask) + c * VOCAB_SIZE)
    hot_c = hot.astype(cdt)                             # exact in bf16 (0/1 values)

    # Layer 1: gather-of-3-rows + add, expressed as one MXU matmul (f32 accumulate).
    h = jnp.dot(hot_c, m_ref[...], preferred_element_type=jnp.float32) + b1_ref[...]
    h = jnp.tanh(h)
    logits = jnp.dot(h.astype(cdt), w2_ref[...],
                     preferred_element_type=jnp.float32) + b2_ref[...]
    out_ref[...] = logits.astype(out_ref.dtype)


def mlp_forward(x, wte, w1, b1, w2, b2, *,
                weights_dtype=jnp.bfloat16, max_tile=4096):
    """x: (B, CONTEXT_LENGTH) int token ids. Returns logits (B, VOCAB_SIZE) f32."""
    B = x.shape[0]
    V, E = wte.shape
    C = CONTEXT_LENGTH
    H = w1.shape[1]
    assert V <= (1 << ID_BITS) and C * ID_BITS <= 32 and C * V <= K_PAD

    # Fold embedding + first Linear: M[c*V + v, :] = wte[v] @ w1[c*E:(c+1)*E, :].
    m_all = jnp.einsum('ve,ceh->cvh',
                       wte.astype(jnp.float32),
                       w1.astype(jnp.float32).reshape(C, E, H)).reshape(C * V, H)
    m_pad = jnp.zeros((K_PAD, H), jnp.float32).at[:C * V, :].set(m_all)
    m_pad = m_pad.astype(weights_dtype)

    # Lane-dense padded second layer (padded columns are exactly zero).
    w2p = jnp.zeros((H, VOCAB_PAD), jnp.float32).at[:, :V].set(
        w2.astype(jnp.float32)).astype(weights_dtype)
    b1r = jnp.reshape(b1, (1, H)).astype(jnp.float32)
    b2p = jnp.zeros((1, VOCAB_PAD), jnp.float32).at[:, :V].set(
        jnp.reshape(b2, (1, V)).astype(jnp.float32))

    # Pack the 3 ids into one int32 per row (5 bits each).
    xi = x.astype(jnp.int32)
    packed = xi[:, 0:1]
    for c in range(1, C):
        packed = packed | (xi[:, c:c + 1] << (ID_BITS * c))

    tb = _choose_batch_tile(B, max_tile)
    b_pad = _round_up(B, tb)
    if b_pad != B:
        packed = jnp.pad(packed, ((0, b_pad - B), (0, 0)))   # pad rows use id 0 (valid)
    nb = b_pad // tb

    wbytes = ((K_PAD * H + H * VOCAB_PAD) * jnp.dtype(weights_dtype).itemsize
              + (H + VOCAB_PAD) * 4)
    cost = pl.CostEstimate(
        flops=2 * b_pad * (K_PAD * H + H * VOCAB_PAD),
        transcendentals=b_pad * H,
        bytes_accessed=b_pad * (4 + VOCAB_PAD * 4) + wbytes,
    )

    out = pl.pallas_call(
        mlp_kernel,
        out_shape=jax.ShapeDtypeStruct((b_pad, VOCAB_PAD), jnp.float32),
        grid_spec=pltpu.PrefetchScalarGridSpec(
            num_scalar_prefetch=0,
            grid=(nb,),
            in_specs=[
                pl.BlockSpec((tb, 1), lambda i: (i, 0)),          # packed ids
                pl.BlockSpec((K_PAD, H), lambda i: (0, 0)),       # folded tables (resident)
                pl.BlockSpec((1, H), lambda i: (0, 0)),           # b1 (resident)
                pl.BlockSpec((H, VOCAB_PAD), lambda i: (0, 0)),   # W2 padded (resident)
                pl.BlockSpec((1, VOCAB_PAD), lambda i: (0, 0)),   # b2 padded (resident)
            ],
            out_specs=pl.BlockSpec((tb, VOCAB_PAD), lambda i: (i, 0)),
        ),
        compiler_params=pltpu.CompilerParams(
            dimension_semantics=("parallel",),
            vmem_limit_bytes=48 * 1024 * 1024),
        cost_estimate=cost,
    )(packed, m_pad, b1r, w2p, b2p)

    return out[:B, :V]


def init_params(key):
    """Deterministic init mimicking PyTorch defaults (shapes from MLP.__init__)."""
    k_wte, k_w1, k_b1, k_w2, k_b2 = jax.random.split(key, 5)
    wte = jax.random.normal(k_wte, (VOCAB_SIZE, EMBEDDING_SIZE), jnp.float32)
    fan1 = EMBEDDING_SIZE * CONTEXT_LENGTH
    bound1 = 1.0 / math.sqrt(fan1)
    w1 = jax.random.uniform(k_w1, (fan1, HIDDEN_SIZE), jnp.float32,
                            minval=-bound1, maxval=bound1)
    b1 = jax.random.uniform(k_b1, (1, HIDDEN_SIZE), jnp.float32,
                            minval=-bound1, maxval=bound1)
    fan2 = HIDDEN_SIZE
    bound2 = 1.0 / math.sqrt(fan2)
    w2 = jax.random.uniform(k_w2, (fan2, VOCAB_SIZE), jnp.float32,
                            minval=-bound2, maxval=bound2)
    b2 = jax.random.uniform(k_b2, (1, VOCAB_SIZE), jnp.float32,
                            minval=-bound2, maxval=bound2)
    return wte, w1, b1, w2, b2


def reference_forward(x, wte, w1, b1, w2, b2):
    emb = jnp.take(wte, x, axis=0)
    flat = emb.reshape(x.shape[0], -1)
    h = jnp.tanh(flat @ w1 + b1)
    return h @ w2 + b2


if __name__ == "__main__":
    key = jax.random.PRNGKey(0)
    k_params, k_x1, k_x2 = jax.random.split(key, 3)
    wte, w1, b1, w2, b2 = init_params(k_params)

    # Small batch, f32-weight path: tight check against the PyTorch-equivalent ref.
    B1 = 8
    x1 = jax.random.randint(k_x1, (B1, CONTEXT_LENGTH), 0, VOCAB_SIZE, jnp.int32)
    logits1 = jax.block_until_ready(
        mlp_forward(x1, wte, w1, b1, w2, b2, weights_dtype=jnp.float32))
    ref1 = reference_forward(x1, wte, w1, b1, w2, b2)
    assert logits1.shape == (B1, VOCAB_SIZE)
    assert jnp.allclose(logits1, ref1, atol=1e-4, rtol=1e-4), \
        float(jnp.max(jnp.abs(logits1 - ref1)))

    # Multi-tile batch (exercises grid + batch padding), default bf16-weight MXU path:
    # looser tolerance covers bf16 rounding of the folded table / W2 only.
    B2 = 24
    x2 = jax.random.randint(k_x2, (B2, CONTEXT_LENGTH), 0, VOCAB_SIZE, jnp.int32)
    logits2 = jax.block_until_ready(mlp_forward(x2, wte, w1, b1, w2, b2))
    ref2 = reference_forward(x2, wte, w1, b1, w2, b2)
    assert logits2.shape == (B2, VOCAB_SIZE)
    assert jnp.allclose(logits2, ref2, atol=5e-2, rtol=5e-2), \
        float(jnp.max(jnp.abs(logits2 - ref2)))

    print("KERNEL_OK")
</pallas_src>

<mosaic_0001>
module attributes {stable_mosaic.version = 11 : i64} {
  func.func @mlp_kernel(%arg0: i32, %arg1: memref<8x1xi32, #tpu.memory_space<vmem>>, %arg2: memref<128x64xf32, #tpu.memory_space<vmem>>, %arg3: memref<1x64xf32, #tpu.memory_space<vmem>>, %arg4: memref<64x128xf32, #tpu.memory_space<vmem>>, %arg5: memref<1x128xf32, #tpu.memory_space<vmem>>, %arg6: memref<8x128xf32, #tpu.memory_space<vmem>>) attributes {dimension_semantics = [#tpu.dimension_semantics<parallel>], iteration_bounds = array<i64: 1>, scalar_prefetch = 0 : i64, scratch_operands = 0 : i64, tpu.core_type = #tpu.core_type<tc>, window_params = [{transform_indices = @transform_0, window_bounds = array<i64: 8, 1>}, {pipeline_mode = #tpu.pipeline_mode<synchronous>, transform_indices = @transform_1, window_bounds = array<i64: 128, 64>}, {pipeline_mode = #tpu.pipeline_mode<synchronous>, transform_indices = @transform_2, window_bounds = array<i64: 1, 64>}, {pipeline_mode = #tpu.pipeline_mode<synchronous>, transform_indices = @transform_3, window_bounds = array<i64: 64, 128>}, {pipeline_mode = #tpu.pipeline_mode<synchronous>, transform_indices = @transform_4, window_bounds = array<i64: 1, 128>}, {transform_indices = @transform_5, window_bounds = array<i64: 8, 128>}]} {
    %c0 = arith.constant 0 : index
    %c0_0 = arith.constant 0 : index
    %0 = vector.load %arg1[%c0, %c0_0] : memref<8x1xi32, #tpu.memory_space<vmem>>, vector<8x1xi32>
    %1 = tpu.iota {dimensions = array<i32: 1>} : vector<8x128xi32>
    %c31_i32 = arith.constant 31 : i32
    %2 = vector.broadcast %c31_i32 : i32 to vector<8x1xi32>
    %3 = arith.andi %0, %2 : vector<8x1xi32>
    %4 = vector.broadcast %3 : vector<8x1xi32> to vector<8x128xi32>
    %5 = arith.cmpi eq, %1, %4 : vector<8x128xi32>
    %c5_i32 = arith.constant 5 : i32
    %6 = vector.broadcast %c5_i32 : i32 to vector<8x1xi32>
    %7 = arith.shrsi %0, %6 : vector<8x1xi32>
    %c31_i32_1 = arith.constant 31 : i32
    %8 = vector.broadcast %c31_i32_1 : i32 to vector<8x1xi32>
    %9 = arith.andi %7, %8 : vector<8x1xi32>
    %c27_i32 = arith.constant 27 : i32
    %10 = vector.broadcast %c27_i32 : i32 to vector<8x1xi32>
    %11 = arith.addi %9, %10 : vector<8x1xi32>
    %12 = vector.broadcast %11 : vector<8x1xi32> to vector<8x128xi32>
    %13 = arith.cmpi eq, %1, %12 : vector<8x128xi32>
    %14 = arith.ori %5, %13 : vector<8x128xi1>
    %c10_i32 = arith.constant 10 : i32
    %15 = vector.broadcast %c10_i32 : i32 to vector<8x1xi32>
    %16 = arith.shrsi %0, %15 : vector<8x1xi32>
    %c31_i32_2 = arith.constant 31 : i32
    %17 = vector.broadcast %c31_i32_2 : i32 to vector<8x1xi32>
    %18 = arith.andi %16, %17 : vector<8x1xi32>
    %c54_i32 = arith.constant 54 : i32
    %19 = vector.broadcast %c54_i32 : i32 to vector<8x1xi32>
    %20 = arith.addi %18, %19 : vector<8x1xi32>
    %21 = vector.broadcast %20 : vector<8x1xi32> to vector<8x128xi32>
    %22 = arith.cmpi eq, %1, %21 : vector<8x128xi32>
    %23 = arith.ori %14, %22 : vector<8x128xi1>
    %24 = arith.extui %23 : vector<8x128xi1> to vector<8x128xi32>
    %25 = arith.sitofp %24 : vector<8x128xi32> to vector<8x128xf32>
    %c0_3 = arith.constant 0 : index
    %c0_4 = arith.constant 0 : index
    %26 = vector.load %arg2[%c0_3, %c0_4] : memref<128x64xf32, #tpu.memory_space<vmem>>, vector<128x64xf32>
    %cst = arith.constant dense<0.000000e+00> : vector<8x64xf32>
    %27 = tpu.matmul %25, %26, %cst {dimension_numbers = #tpu.dot_dimension_numbers<[1], [0], [0], [1], [0, 0, 1, 1], [], []>} : vector<8x128xf32>, vector<128x64xf32>, vector<8x64xf32> -> vector<8x64xf32>
    %c0_5 = arith.constant 0 : index
    %c0_6 = arith.constant 0 : index
    %28 = vector.load %arg3[%c0_5, %c0_6] : memref<1x64xf32, #tpu.memory_space<vmem>>, vector<1x64xf32>
    %29 = vector.broadcast %28 : vector<1x64xf32> to vector<8x64xf32>
    %30 = arith.addf %27, %29 : vector<8x64xf32>
    %31 = math.tanh %30 : vector<8x64xf32>
    %c0_7 = arith.constant 0 : index
    %c0_8 = arith.constant 0 : index
    %32 = vector.load %arg4[%c0_7, %c0_8] : memref<64x128xf32, #tpu.memory_space<vmem>>, vector<64x128xf32>
    %cst_9 = arith.constant dense<0.000000e+00> : vector<8x128xf32>
    %33 = tpu.matmul %31, %32, %cst_9 {dimension_numbers = #tpu.dot_dimension_numbers<[1], [0], [0], [1], [0, 0, 1, 1], [], []>} : vector<8x64xf32>, vector<64x128xf32>, vector<8x128xf32> -> vector<8x128xf32>
    %c0_10 = arith.constant 0 : index
    %c0_11 = arith.constant 0 : index
    %34 = vector.load %arg5[%c0_10, %c0_11] : memref<1x128xf32, #tpu.memory_space<vmem>>, vector<1x128xf32>
    %35 = vector.broadcast %34 : vector<1x128xf32> to vector<8x128xf32>
    %36 = arith.addf %33, %35 : vector<8x128xf32>
    %c0_12 = arith.constant 0 : index
    %c0_13 = arith.constant 0 : index
    %37 = vector.load %arg6[%c0_12, %c0_13] : memref<8x128xf32, #tpu.memory_space<vmem>>, vector<8x128xf32>
    tpu.vector_store %arg6[%c0_12, %c0_13], %36 {strides = array<i32>} : memref<8x128xf32, #tpu.memory_space<vmem>>, vector<8x128xf32>,
    return
  }
  func.func @transform_0(%arg0: i32) -> (i32, i32) {
    %c0_i32 = arith.constant 0 : i32
    %c0_i32_0 = arith.constant 0 : i32
    return %arg0, %c0_i32 : i32, i32
  }
  func.func @transform_1(%arg0: i32) -> (i32, i32) {
    %c0_i32 = arith.constant 0 : i32
    %c0_i32_0 = arith.constant 0 : i32
    %c0_i32_1 = arith.constant 0 : i32
    return %c0_i32, %c0_i32_0 : i32, i32
  }
  func.func @transform_2(%arg0: i32) -> (i32, i32) {
    %c0_i32 = arith.constant 0 : i32
    %c0_i32_0 = arith.constant 0 : i32
    %c0_i32_1 = arith.constant 0 : i32
    return %c0_i32, %c0_i32_0 : i32, i32
  }
  func.func @transform_3(%arg0: i32) -> (i32, i32) {
    %c0_i32 = arith.constant 0 : i32
    %c0_i32_0 = arith.constant 0 : i32
    %c0_i32_1 = arith.constant 0 : i32
    return %c0_i32, %c0_i32_0 : i32, i32
  }
  func.func @transform_4(%arg0: i32) -> (i32, i32) {
    %c0_i32 = arith.constant 0 : i32
    %c0_i32_0 = arith.constant 0 : i32
    %c0_i32_1 = arith.constant 0 : i32
    return %c0_i32, %c0_i32_0 : i32, i32
  }
  func.func @transform_5(%arg0: i32) -> (i32, i32) {
    %c0_i32 = arith.constant 0 : i32
    %c0_i32_0 = arith.constant 0 : i32
    return %arg0, %c0_i32 : i32, i32
  }
}

</mosaic_0001>

<llo_original>
// kernel: tpu_custom_call.1
$region0: #{tpu_custom_call.1}
  #allocation0 [shape = 'u32[]', space=smem, size = 0x4, offset = 0x4, fixed_abs, tag = 'smem constant byte address 0x4 - core index']
  #allocation1 [shape = 'u32[144,128]{1,0:T(1,128)}', space=vmem, size = 0x12000, scoped, tag = 'internal scratch']
  %s0 = inlined_call_operand.vmem [shape: s32[8,1], index: 0, kind: input, shape index: {}]
  %s1 = inlined_call_operand.vmem [shape: f32[128,64], index: 1, kind: input, shape index: {}]
  %s2 = inlined_call_operand.vmem [shape: f32[1,64], index: 2, kind: input, shape index: {}]
  %s3 = inlined_call_operand.vmem [shape: f32[64,128], index: 3, kind: input, shape index: {}]
  %s4 = inlined_call_operand.vmem [shape: f32[1,128], index: 4, kind: input, shape index: {}]
  %s5 = inlined_call_operand.hbm [shape: f32[8,128], index: 5, kind: output, shape index: {}]
  %s6 = sld [smem:[#allocation0]]
  $region30: #{tpu_custom_call.1} parent=0
    _
  %s8 = ssub.s32 1, %s6
  %s9 = scalar_select 0, %s8, %s6
  $region1: #{tpu_custom_call.1} parent=0
    #allocation2 [shape = 'u8[4096]{0}', space=vmem, size = 0x1000, scoped, tag = 'output window, operand 0, single buffered']
    #allocation3 [shape = 's32[1]{0}', space=sflag, size = 0x4, scoped, tag = 'scoped memory for tpu_custom_call.1']
    %10 = vsyncpa [#allocation3], 0
    // Predicated region
    $region2: #{tpu_custom_call.1} parent=1 // pred_check
      _
    $region3: #{tpu_custom_call.1} parent=1 // pred_check_branch
      %12 = sbr.rel (0) target = $region5
    $region4: #{tpu_custom_call.1} parent=1 // pred_region
      _
    $region5: #{tpu_custom_call.1} parent=1 // pred_fallthru
      _
    // Predicated region
    $region6: #{tpu_custom_call.1} parent=1 // pred_check
      _
    $region7: #{tpu_custom_call.1} parent=1 // pred_check_branch
      %14 = sbr.rel (0) target = $region9
    $region8: #{tpu_custom_call.1} parent=1 // pred_region
      _
    $region9: #{tpu_custom_call.1} parent=1 // pred_fallthru
      _
    // Predicated region
    $region10: #{tpu_custom_call.1} parent=1 // pred_check
      _
    $region11: #{tpu_custom_call.1} parent=1 // pred_check_branch
      %16 = sbr.rel (0) target = $region13
    $region12: #{tpu_custom_call.1} parent=1 // pred_region
      _
    $region13: #{tpu_custom_call.1} parent=1 // pred_fallthru
      _
    // Predicated region
    $region14: #{tpu_custom_call.1} parent=1 // pred_check
      _
    $region15: #{tpu_custom_call.1} parent=1 // pred_check_branch
      %18 = sbr.rel (0) target = $region17
    $region16: #{tpu_custom_call.1} parent=1 // pred_region
      _
    $region17: #{tpu_custom_call.1} parent=1 // pred_fallthru
      _
    // Predicated region
    $region18: #{tpu_custom_call.1} parent=1 // pred_check
      _
    $region19: #{tpu_custom_call.1} parent=1 // pred_check_branch
      %20 = sbr.rel (0) target = $region21
    $region20: #{tpu_custom_call.1} parent=1 // pred_region
      _
    $region21: #{tpu_custom_call.1} parent=1 // pred_fallthru
      _
    %v21 = vld [vmem:[%s0] sm:$0xff]
    %v22 = vlaneseq
    %v23 = vand.u32 %v22, 127
    %v24 = vand.u32 %v21, 31
    %25 = vset.pattern.permute.xlu0 0
    %26 = vperm.xlu0 %25, %v24
    %v27 = vpop.permute.xlu0 %26
    %vm28 = vcmp.eq.s32.totalorder %v23, %v27
    %v29 = vshra.s32 %v21, 5
    %v30 = vand.u32 %v29, 31
    %v31 = vadd.s32 %v30, 27
    %32 = vset.pattern.permute.xlu0 0
    %33 = vperm.xlu0 %32, %v31
    %v34 = vpop.permute.xlu0 %33
    %vm35 = vcmp.eq.s32.totalorder %v23, %v34
    %vm36 = vmor %vm28, %vm35
    %v37 = vshra.s32 %v21, 10
    %v38 = vand.u32 %v37, 31
    %v39 = vadd.s32 %v38, 54
    %40 = vset.pattern.permute.xlu0 0
    %41 = vperm.xlu0 %40, %v39
    %v42 = vpop.permute.xlu0 %41
    %vm43 = vcmp.eq.s32.totalorder %v23, %v42
    %vm44 = vmor %vm36, %vm43
    %v45 = vsel %vm44, 1, 0
    %v46 = vcvt.s32.f32 %v45
    %v47 = vld [vmem:[%s1] sm:$0xff]
    %v48 = vld [vmem:[%s1 + $0x8] sm:$0xff]
    %v49 = vld [vmem:[%s1 + $0x10] sm:$0xff]
    %v50 = vld [vmem:[%s1 + $0x18] sm:$0xff]
    %v51 = vld [vmem:[%s1 + $0x20] sm:$0xff]
    %v52 = vld [vmem:[%s1 + $0x28] sm:$0xff]
    %v53 = vld [vmem:[%s1 + $0x30] sm:$0xff]
    %v54 = vld [vmem:[%s1 + $0x38] sm:$0xff]
    %v55 = vld [vmem:[%s1 + $0x40] sm:$0xff]
    %v56 = vld [vmem:[%s1 + $0x48] sm:$0xff]
    %v57 = vld [vmem:[%s1 + $0x50] sm:$0xff]
    %v58 = vld [vmem:[%s1 + $0x58] sm:$0xff]
    %v59 = vld [vmem:[%s1 + $0x60] sm:$0xff]
    %v60 = vld [vmem:[%s1 + $0x68] sm:$0xff]
    %v61 = vld [vmem:[%s1 + $0x70] sm:$0xff]
    %v62 = vld [vmem:[%s1 + $0x78] sm:$0xff]
    %v63 = vld [vmem:[%s2] sm:$0x1]
    %v65 = vlaneseq
    %v66 = vshrl.u32 %v65, 7
    %v67 = vsub.s32 0, %v66
    %v68 = vrot.slane %v63, %v67
    %70 = vmatprep.subr.mxu0 0.0
    %71 = vmatpush1.msra.mxu0 %v47
    %72 = vmatprep.subr.mxu0 0.0
    %73 = vmatpush1.msra.mxu0 %v48
    %74 = vmatprep.subr.mxu0 0.0
    %75 = vmatpush1.msra.mxu0 %v49
    %76 = vmatprep.subr.mxu0 0.0
    %77 = vmatpush1.msra.mxu0 %v50
    %78 = vmatprep.subr.mxu0 0.0
    %79 = vmatpush1.msra.mxu0 %v51
    %80 = vmatprep.subr.mxu0 0.0
    %81 = vmatpush1.msra.mxu0 %v52
    %82 = vmatprep.subr.mxu0 0.0
    %83 = vmatpush1.msra.mxu0 %v53
    %84 = vmatprep.subr.mxu0 0.0
    %85 = vmatpush1.msra.mxu0 %v54
    %86 = vmatprep.subr.mxu0 0.0
    %87 = vmatpush1.msra.mxu0 %v55
    %88 = vmatprep.subr.mxu0 0.0
    %89 = vmatpush1.msra.mxu0 %v56
    %90 = vmatprep.subr.mxu0 0.0
    %91 = vmatpush1.msra.mxu0 %v57
    %92 = vmatprep.subr.mxu0 0.0
    %93 = vmatpush1.msra.mxu0 %v58
    %94 = vmatprep.subr.mxu0 0.0
    %95 = vmatpush1.msra.mxu0 %v59
    %96 = vmatprep.subr.mxu0 0.0
    %97 = vmatpush1.msra.mxu0 %v60
    %98 = vmatprep.subr.mxu0 0.0
    %99 = vmatpush1.msra.mxu0 %v61
    %100 = vmatprep.subr.mxu0 0.0
    %101 = vmatpush1.msra.mxu0 %v62
    %102 = vmatprep.subr.mxu0 0.0
    %103 = vmatpush1.msra.mxu0 0.0
    %104 = vmatprep.subr.mxu0 0.0
    %105 = vmatpush1.msra.mxu0 0.0
    %106 = vmatprep.subr.mxu0 0.0
    %107 = vmatpush1.msra.mxu0 0.0
    %108 = vmatprep.subr.mxu0 0.0
    %109 = vmatpush1.msra.mxu0 0.0
    %110 = vmatprep.subr.mxu0 0.0
    %111 = vmatpush1.msra.mxu0 0.0
    %112 = vmatprep.subr.mxu0 0.0
    %113 = vmatpush1.msra.mxu0 0.0
    %114 = vmatprep.subr.mxu0 0.0
    %115 = vmatpush1.msra.mxu0 0.0
    %116 = vmatprep.subr.mxu0 0.0
    %117 = vmatpush1.msra.mxu0 0.0
    %118 = vmatprep.subr.mxu0 0.0
    %119 = vmatpush1.msra.mxu0 0.0
    %120 = vmatprep.subr.mxu0 0.0
    %121 = vmatpush1.msra.mxu0 0.0
    %122 = vmatprep.subr.mxu0 0.0
    %123 = vmatpush1.msra.mxu0 0.0
    %124 = vmatprep.subr.mxu0 0.0
    %125 = vmatpush1.msra.mxu0 0.0
    %126 = vmatprep.subr.mxu0 0.0
    %127 = vmatpush1.msra.mxu0 0.0
    %128 = vmatprep.subr.mxu0 0.0
    %129 = vmatpush1.msra.mxu0 0.0
    %130 = vmatprep.subr.mxu0 0.0
    %131 = vmatpush1.msra.mxu0 0.0
    %132 = vmatprep.subr.mxu0 0.0
    %133 = vmatpush1.msra.mxu0 0.0
    %134 = vmatprep.mubr.f32.mxu0 0.0
    %135 = vmatmul.mubr.f32.gmra.mrb[0].mxu0 %v46
    %v136 = vpop.f32.mrb[0].mxu0
    %v137 = vadd.f32 %v68, %v136
    %v138 = vpop.f32.mrb[0].mxu0
    %139 = vdwg.mxu0
    %v140 = vtanh.pop %v137
    %v141 = vld [vmem:[%s3] sm:$0xff]
    %v142 = vld [vmem:[%s3 + $0x8] sm:$0xff]
    %v143 = vld [vmem:[%s3 + $0x10] sm:$0xff]
    %v144 = vld [vmem:[%s3 + $0x18] sm:$0xff]
    %v145 = vld [vmem:[%s3 + $0x20] sm:$0xff]
    %v146 = vld [vmem:[%s3 + $0x28] sm:$0xff]
    %v147 = vld [vmem:[%s3 + $0x30] sm:$0xff]
    %v148 = vld [vmem:[%s3 + $0x38] sm:$0xff]
    %v149 = vld [vmem:[%s4] sm:$0x1]
    %v151 = vlaneseq
    %v152 = vshrl.u32 %v151, 7
    %v153 = vsub.s32 0, %v152
    %v154 = vrot.slane %v149, %v153
    %vm156 = vcmask 523264
    %v158 = vsel %vm156, %v140, 0
    %160 = vmatprep.subr.mxu0 0.0
    %161 = vmatpush1.msra.mxu0 %v141
    %162 = vmatprep.subr.mxu0 0.0
    %163 = vmatpush1.msra.mxu0 %v142
    %164 = vmatprep.subr.mxu0 0.0
    %165 = vmatpush1.msra.mxu0 %v143
    %166 = vmatprep.subr.mxu0 0.0
    %167 = vmatpush1.msra.mxu0 %v144
    %168 = vmatprep.subr.mxu0 0.0
    %169 = vmatpush1.msra.mxu0 %v145
    %170 = vmatprep.subr.mxu0 0.0
    %171 = vmatpush1.msra.mxu0 %v146
    %172 = vmatprep.subr.mxu0 0.0
    %173 = vmatpush1.msra.mxu0 %v147
    %174 = vmatprep.subr.mxu0 0.0
    %175 = vmatpush1.msra.mxu0 %v148
    %176 = vmatprep.subr.mxu0 0.0
    %177 = vmatpush1.msra.mxu0 0.0
    %178 = vmatprep.subr.mxu0 0.0
    %179 = vmatpush1.msra.mxu0 0.0
    %180 = vmatprep.subr.mxu0 0.0
    %181 = vmatpush1.msra.mxu0 0.0
    %182 = vmatprep.subr.mxu0 0.0
    %183 = vmatpush1.msra.mxu0 0.0
    %184 = vmatprep.subr.mxu0 0.0
    %185 = vmatpush1.msra.mxu0 0.0
    %186 = vmatprep.subr.mxu0 0.0
    %187 = vmatpush1.msra.mxu0 0.0
    %188 = vmatprep.subr.mxu0 0.0
    %189 = vmatpush1.msra.mxu0 0.0
    %190 = vmatprep.subr.mxu0 0.0
    %191 = vmatpush1.msra.mxu0 0.0
    %192 = vmatprep.subr.mxu0 0.0
    %193 = vmatpush1.msra.mxu0 0.0
    %194 = vmatprep.subr.mxu0 0.0
    %195 = vmatpush1.msra.mxu0 0.0
    %196 = vmatprep.subr.mxu0 0.0
    %197 = vmatpush1.msra.mxu0 0.0
    %198 = vmatprep.subr.mxu0 0.0
    %199 = vmatpush1.msra.mxu0 0.0
    %200 = vmatprep.subr.mxu0 0.0
    %201 = vmatpush1.msra.mxu0 0.0
    %202 = vmatprep.subr.mxu0 0.0
    %203 = vmatpush1.msra.mxu0 0.0
    %204 = vmatprep.subr.mxu0 0.0
    %205 = vmatpush1.msra.mxu0 0.0
    %206 = vmatprep.subr.mxu0 0.0
    %207 = vmatpush1.msra.mxu0 0.0
    %208 = vmatprep.subr.mxu0 0.0
    %209 = vmatpush1.msra.mxu0 0.0
    %210 = vmatprep.subr.mxu0 0.0
    %211 = vmatpush1.msra.mxu0 0.0
    %212 = vmatprep.subr.mxu0 0.0
    %213 = vmatpush1.msra.mxu0 0.0
    %214 = vmatprep.subr.mxu0 0.0
    %215 = vmatpush1.msra.mxu0 0.0
    %216 = vmatprep.subr.mxu0 0.0
    %217 = vmatpush1.msra.mxu0 0.0
    %218 = vmatprep.subr.mxu0 0.0
    %219 = vmatpush1.msra.mxu0 0.0
    %220 = vmatprep.subr.mxu0 0.0
    %221 = vmatpush1.msra.mxu0 0.0
    %222 = vmatprep.subr.mxu0 0.0
    %223 = vmatpush1.msra.mxu0 0.0
    %224 = vmatprep.mubr.f32.mxu0 0.0
    %225 = vmatmul.mubr.f32.gmra.mrb[0].mxu0 %v158
    %v226 = vpop.f32.mrb[0].mxu0
    %v227 = vadd.f32 %v154, %v226
    %v228 = vpop.f32.mrb[0].mxu0
    %229 = vdwg.mxu0
    %230 = vst [vmem:[#allocation2] sm:$0xff] %v227
    // Predicated region
    $region22: #{tpu_custom_call.1} parent=1 // pred_check
      _
    $region23: #{tpu_custom_call.1} parent=1 // pred_check_branch
      %232 = sbr.rel (0) target = $region25
    $region24: #{tpu_custom_call.1} parent=1 // pred_region
      %s234 = ssub.s32 128, 128
      %235 = vsyncadd [#allocation3], %s234
      %s237 = sshll.u32 [#allocation2], 4
      %s238 = int_to_ptr.vmem [resolvable:$true] %s237
      %240 = dma.vmem_to_hbm [thread:$0]  %s238, 128, %s5, [#allocation3]
    $region25: #{tpu_custom_call.1} parent=1 // pred_fallthru
      _
    // Predicated region
    $region26: #{tpu_custom_call.1} parent=1 // pred_check
      _
    $region27: #{tpu_custom_call.1} parent=1 // pred_check_branch
      %242 = sbr.rel (0) target = $region29
    $region28: #{tpu_custom_call.1} parent=1 // pred_region
      %243 = dma.done [#allocation3], 128
    $region29: #{tpu_custom_call.1} parent=1 // pred_fallthru
      _
    %244 = vsyncpa [#allocation3], 1

</llo_original>
